<compile_context>
chip_gen: v7x
topology: tpu7x:2x2x1
jax: 0.10.0
libtpu: 0.0.40
codegen_flags: <defaults>
</compile_context>

<pallas_src>
import jax
import jax.numpy as jnp
from jax.experimental import pallas as pl
from jax.experimental.pallas import tpu as pltpu


def mlp_kernel(x_ref, w1_ref, b1_ref, w2_ref, b2_ref, o_ref):
    # x_ref: (2, Rt, 128) VMEM tile, batch dense on (sublane, lane).
    # w1/b1/w2/b2: SMEM refs in PyTorch layouts (8,2), (8,), (1,8), (1,).
    x0 = x_ref[0]                                   # (Rt, 128)
    x1 = x_ref[1]                                   # (Rt, 128)

    acc = None
    for f in range(8):                              # unrolled at trace time
        # layer1 + ReLU for hidden feature f: scalar-broadcast FMAs, full-vreg dense.
        h = jnp.maximum(w1_ref[f, 0] * x0 + w1_ref[f, 1] * x1 + b1_ref[f], 0.0)
        t = w2_ref[0, f] * h                        # layer2 partial sum
        acc = t if acc is None else acc + t
    acc = acc + b2_ref[0]

    o_ref[...] = acc.astype(o_ref.dtype)            # dense (Rt, 128) unmasked store


def my_neural_net(x, w1, b1, w2, b2, *, target_rows_per_tile=4096):
    """x: (B, 2) f32. PyTorch layouts: w1 (8,2), b1 (8,), w2 (1,8), b2 (1,)."""
    B = x.shape[0]
    R = pl.cdiv(B, 128)                             # 128-lane rows of batch

    # Row tile: multiple of 8 (sublane) unless the whole array is one block; keep >=2
    # grid steps when possible (v7x megacore) and cap per-step VMEM (~12 MiB dbl-buffered).
    if R <= 8:
        Rt = R
    else:
        steps = max(2, pl.cdiv(R, target_rows_per_tile))
        Rt = pl.cdiv(pl.cdiv(R, steps), 8) * 8
    Rp = pl.cdiv(R, Rt) * Rt
    Bp = Rp * 128

    # Feature-major + pad + dense 2-D reshape (ideally produced upstream in this layout).
    xT = x.T.astype(jnp.float32)                    # (2, B)
    if Bp != B:
        xT = jnp.pad(xT, ((0, 0), (0, Bp - B)))
    xT = xT.reshape(2, Rp, 128)

    out2d = pl.pallas_call(
        mlp_kernel,
        out_shape=jax.ShapeDtypeStruct((Rp, 128), jnp.float32),
        grid_spec=pltpu.PrefetchScalarGridSpec(
            num_scalar_prefetch=0,
            grid=(Rp // Rt,),
            in_specs=[
                pl.BlockSpec((2, Rt, 128), lambda i: (0, i, 0)),    # batch tile (VMEM)
                pl.BlockSpec(memory_space=pltpu.MemorySpace.SMEM),  # w1 (8,2)
                pl.BlockSpec(memory_space=pltpu.MemorySpace.SMEM),  # b1 (8,)
                pl.BlockSpec(memory_space=pltpu.MemorySpace.SMEM),  # w2 (1,8)
                pl.BlockSpec(memory_space=pltpu.MemorySpace.SMEM),  # b2 (1,)
            ],
            out_specs=pl.BlockSpec((Rt, 128), lambda i: (i, 0)),
        ),
        compiler_params=pltpu.CompilerParams(
            dimension_semantics=("parallel",),       # 2x on v7x when grid >= 2 steps
            vmem_limit_bytes=32 * 1024 * 1024,
        ),
    )(xT, w1, b1, w2, b2)

    return out2d.reshape(-1)[:B].reshape(B, 1)       # back to (B, 1)


def init_params(key):
    # PyTorch default Linear init: U(-1/sqrt(fan_in), 1/sqrt(fan_in)), PyTorch layouts.
    k1, k2, k3, k4 = jax.random.split(key, 4)
    bound1 = 1.0 / jnp.sqrt(2.0)
    w1 = jax.random.uniform(k1, (8, 2), jnp.float32, -bound1, bound1)   # (out, in)
    b1 = jax.random.uniform(k2, (8,), jnp.float32, -bound1, bound1)
    bound2 = 1.0 / jnp.sqrt(8.0)
    w2 = jax.random.uniform(k3, (1, 8), jnp.float32, -bound2, bound2)
    b2 = jax.random.uniform(k4, (1,), jnp.float32, -bound2, bound2)
    return w1, b1, w2, b2


if __name__ == "__main__":
    key = jax.random.PRNGKey(0)
    kx, kp = jax.random.split(key)
    # batch=8, in_features=2 (as implied by nn.Linear(2, 8))
    x = jax.random.normal(kx, (8, 2), jnp.float32)
    w1, b1, w2, b2 = init_params(kp)

    out = my_neural_net(x, w1, b1, w2, b2)
    out = jax.block_until_ready(out)

    # Reference in plain JAX (PyTorch layout: y = relu(x @ W1^T + b1) @ W2^T + b2)
    ref = jnp.maximum(x @ w1.T + b1, 0.0) @ w2.T + b2
    assert out.shape == (8, 1)
    assert jnp.allclose(out, ref, atol=1e-5, rtol=1e-5)
    print("KERNEL_OK")
</pallas_src>

<mosaic_0001>
module attributes {stable_mosaic.version = 11 : i64} {
  func.func @mlp_kernel(%arg0: i32, %arg1: memref<2x1x128xf32, #tpu.memory_space<vmem>>, %arg2: memref<8x2xf32, #tpu.memory_space<smem>>, %arg3: memref<8xf32, #tpu.memory_space<smem>>, %arg4: memref<1x8xf32, #tpu.memory_space<smem>>, %arg5: memref<1xf32, #tpu.memory_space<smem>>, %arg6: memref<1x128xf32, #tpu.memory_space<vmem>>) attributes {dimension_semantics = [#tpu.dimension_semantics<parallel>], iteration_bounds = array<i64: 1>, scalar_prefetch = 0 : i64, scratch_operands = 0 : i64, tpu.core_type = #tpu.core_type<tc>, window_params = [{transform_indices = @transform_0, window_bounds = array<i64: 2, 1, 128>}, {transform_indices = @transform_1, window_bounds = array<i64: 8, 2>}, {transform_indices = @transform_2, window_bounds = array<i64: 8>}, {transform_indices = @transform_3, window_bounds = array<i64: 1, 8>}, {transform_indices = @transform_4, window_bounds = array<i64: 1>}, {transform_indices = @transform_5, window_bounds = array<i64: 1, 128>}]} {
    %c0 = arith.constant 0 : index
    %c0_0 = arith.constant 0 : index
    %c0_1 = arith.constant 0 : index
    %0 = vector.load %arg1[%c0, %c0_0, %c0_1] : memref<2x1x128xf32, #tpu.memory_space<vmem>>, vector<1x1x128xf32>
    %1 = vector.shape_cast %0 : vector<1x1x128xf32> to vector<1x128xf32>
    %c1 = arith.constant 1 : index
    %c0_2 = arith.constant 0 : index
    %c0_3 = arith.constant 0 : index
    %2 = vector.load %arg1[%c1, %c0_2, %c0_3] : memref<2x1x128xf32, #tpu.memory_space<vmem>>, vector<1x1x128xf32>
    %3 = vector.shape_cast %2 : vector<1x1x128xf32> to vector<1x128xf32>
    %c0_4 = arith.constant 0 : index
    %c0_5 = arith.constant 0 : index
    %4 = memref.load %arg2[%c0_4, %c0_5] : memref<8x2xf32, #tpu.memory_space<smem>>
    %5 = vector.broadcast %4 : f32 to vector<1x128xf32>
    %6 = arith.mulf %5, %1 : vector<1x128xf32>
    %c0_6 = arith.constant 0 : index
    %c1_7 = arith.constant 1 : index
    %7 = memref.load %arg2[%c0_6, %c1_7] : memref<8x2xf32, #tpu.memory_space<smem>>
    %8 = vector.broadcast %7 : f32 to vector<1x128xf32>
    %9 = arith.mulf %8, %3 : vector<1x128xf32>
    %10 = arith.addf %6, %9 : vector<1x128xf32>
    %c0_8 = arith.constant 0 : index
    %11 = memref.load %arg3[%c0_8] : memref<8xf32, #tpu.memory_space<smem>>
    %12 = vector.broadcast %11 : f32 to vector<1x128xf32>
    %13 = arith.addf %10, %12 : vector<1x128xf32>
    %cst = arith.constant 0.000000e+00 : f32
    %14 = vector.broadcast %cst : f32 to vector<1x128xf32>
    %15 = arith.maximumf %13, %14 : vector<1x128xf32>
    %c0_9 = arith.constant 0 : index
    %c0_10 = arith.constant 0 : index
    %16 = memref.load %arg4[%c0_9, %c0_10] : memref<1x8xf32, #tpu.memory_space<smem>>
    %17 = vector.broadcast %16 : f32 to vector<1x128xf32>
    %18 = arith.mulf %17, %15 : vector<1x128xf32>
    %c1_11 = arith.constant 1 : index
    %c0_12 = arith.constant 0 : index
    %19 = memref.load %arg2[%c1_11, %c0_12] : memref<8x2xf32, #tpu.memory_space<smem>>
    %20 = vector.broadcast %19 : f32 to vector<1x128xf32>
    %21 = arith.mulf %20, %1 : vector<1x128xf32>
    %c1_13 = arith.constant 1 : index
    %c1_14 = arith.constant 1 : index
    %22 = memref.load %arg2[%c1_13, %c1_14] : memref<8x2xf32, #tpu.memory_space<smem>>
    %23 = vector.broadcast %22 : f32 to vector<1x128xf32>
    %24 = arith.mulf %23, %3 : vector<1x128xf32>
    %25 = arith.addf %21, %24 : vector<1x128xf32>
    %c1_15 = arith.constant 1 : index
    %26 = memref.load %arg3[%c1_15] : memref<8xf32, #tpu.memory_space<smem>>
    %27 = vector.broadcast %26 : f32 to vector<1x128xf32>
    %28 = arith.addf %25, %27 : vector<1x128xf32>
    %cst_16 = arith.constant 0.000000e+00 : f32
    %29 = vector.broadcast %cst_16 : f32 to vector<1x128xf32>
    %30 = arith.maximumf %28, %29 : vector<1x128xf32>
    %c0_17 = arith.constant 0 : index
    %c1_18 = arith.constant 1 : index
    %31 = memref.load %arg4[%c0_17, %c1_18] : memref<1x8xf32, #tpu.memory_space<smem>>
    %32 = vector.broadcast %31 : f32 to vector<1x128xf32>
    %33 = arith.mulf %32, %30 : vector<1x128xf32>
    %34 = arith.addf %18, %33 : vector<1x128xf32>
    %c2 = arith.constant 2 : index
    %c0_19 = arith.constant 0 : index
    %35 = memref.load %arg2[%c2, %c0_19] : memref<8x2xf32, #tpu.memory_space<smem>>
    %36 = vector.broadcast %35 : f32 to vector<1x128xf32>
    %37 = arith.mulf %36, %1 : vector<1x128xf32>
    %c2_20 = arith.constant 2 : index
    %c1_21 = arith.constant 1 : index
    %38 = memref.load %arg2[%c2_20, %c1_21] : memref<8x2xf32, #tpu.memory_space<smem>>
    %39 = vector.broadcast %38 : f32 to vector<1x128xf32>
    %40 = arith.mulf %39, %3 : vector<1x128xf32>
    %41 = arith.addf %37, %40 : vector<1x128xf32>
    %c2_22 = arith.constant 2 : index
    %42 = memref.load %arg3[%c2_22] : memref<8xf32, #tpu.memory_space<smem>>
    %43 = vector.broadcast %42 : f32 to vector<1x128xf32>
    %44 = arith.addf %41, %43 : vector<1x128xf32>
    %cst_23 = arith.constant 0.000000e+00 : f32
    %45 = vector.broadcast %cst_23 : f32 to vector<1x128xf32>
    %46 = arith.maximumf %44, %45 : vector<1x128xf32>
    %c0_24 = arith.constant 0 : index
    %c2_25 = arith.constant 2 : index
    %47 = memref.load %arg4[%c0_24, %c2_25] : memref<1x8xf32, #tpu.memory_space<smem>>
    %48 = vector.broadcast %47 : f32 to vector<1x128xf32>
    %49 = arith.mulf %48, %46 : vector<1x128xf32>
    %50 = arith.addf %34, %49 : vector<1x128xf32>
    %c3 = arith.constant 3 : index
    %c0_26 = arith.constant 0 : index
    %51 = memref.load %arg2[%c3, %c0_26] : memref<8x2xf32, #tpu.memory_space<smem>>
    %52 = vector.broadcast %51 : f32 to vector<1x128xf32>
    %53 = arith.mulf %52, %1 : vector<1x128xf32>
    %c3_27 = arith.constant 3 : index
    %c1_28 = arith.constant 1 : index
    %54 = memref.load %arg2[%c3_27, %c1_28] : memref<8x2xf32, #tpu.memory_space<smem>>
    %55 = vector.broadcast %54 : f32 to vector<1x128xf32>
    %56 = arith.mulf %55, %3 : vector<1x128xf32>
    %57 = arith.addf %53, %56 : vector<1x128xf32>
    %c3_29 = arith.constant 3 : index
    %58 = memref.load %arg3[%c3_29] : memref<8xf32, #tpu.memory_space<smem>>
    %59 = vector.broadcast %58 : f32 to vector<1x128xf32>
    %60 = arith.addf %57, %59 : vector<1x128xf32>
    %cst_30 = arith.constant 0.000000e+00 : f32
    %61 = vector.broadcast %cst_30 : f32 to vector<1x128xf32>
    %62 = arith.maximumf %60, %61 : vector<1x128xf32>
    %c0_31 = arith.constant 0 : index
    %c3_32 = arith.constant 3 : index
    %63 = memref.load %arg4[%c0_31, %c3_32] : memref<1x8xf32, #tpu.memory_space<smem>>
    %64 = vector.broadcast %63 : f32 to vector<1x128xf32>
    %65 = arith.mulf %64, %62 : vector<1x128xf32>
    %66 = arith.addf %50, %65 : vector<1x128xf32>
    %c4 = arith.constant 4 : index
    %c0_33 = arith.constant 0 : index
    %67 = memref.load %arg2[%c4, %c0_33] : memref<8x2xf32, #tpu.memory_space<smem>>
    %68 = vector.broadcast %67 : f32 to vector<1x128xf32>
    %69 = arith.mulf %68, %1 : vector<1x128xf32>
    %c4_34 = arith.constant 4 : index
    %c1_35 = arith.constant 1 : index
    %70 = memref.load %arg2[%c4_34, %c1_35] : memref<8x2xf32, #tpu.memory_space<smem>>
    %71 = vector.broadcast %70 : f32 to vector<1x128xf32>
    %72 = arith.mulf %71, %3 : vector<1x128xf32>
    %73 = arith.addf %69, %72 : vector<1x128xf32>
    %c4_36 = arith.constant 4 : index
    %74 = memref.load %arg3[%c4_36] : memref<8xf32, #tpu.memory_space<smem>>
    %75 = vector.broadcast %74 : f32 to vector<1x128xf32>
    %76 = arith.addf %73, %75 : vector<1x128xf32>
    %cst_37 = arith.constant 0.000000e+00 : f32
    %77 = vector.broadcast %cst_37 : f32 to vector<1x128xf32>
    %78 = arith.maximumf %76, %77 : vector<1x128xf32>
    %c0_38 = arith.constant 0 : index
    %c4_39 = arith.constant 4 : index
    %79 = memref.load %arg4[%c0_38, %c4_39] : memref<1x8xf32, #tpu.memory_space<smem>>
    %80 = vector.broadcast %79 : f32 to vector<1x128xf32>
    %81 = arith.mulf %80, %78 : vector<1x128xf32>
    %82 = arith.addf %66, %81 : vector<1x128xf32>
    %c5 = arith.constant 5 : index
    %c0_40 = arith.constant 0 : index
    %83 = memref.load %arg2[%c5, %c0_40] : memref<8x2xf32, #tpu.memory_space<smem>>
    %84 = vector.broadcast %83 : f32 to vector<1x128xf32>
    %85 = arith.mulf %84, %1 : vector<1x128xf32>
    %c5_41 = arith.constant 5 : index
    %c1_42 = arith.constant 1 : index
    %86 = memref.load %arg2[%c5_41, %c1_42] : memref<8x2xf32, #tpu.memory_space<smem>>
    %87 = vector.broadcast %86 : f32 to vector<1x128xf32>
    %88 = arith.mulf %87, %3 : vector<1x128xf32>
    %89 = arith.addf %85, %88 : vector<1x128xf32>
    %c5_43 = arith.constant 5 : index
    %90 = memref.load %arg3[%c5_43] : memref<8xf32, #tpu.memory_space<smem>>
    %91 = vector.broadcast %90 : f32 to vector<1x128xf32>
    %92 = arith.addf %89, %91 : vector<1x128xf32>
    %cst_44 = arith.constant 0.000000e+00 : f32
    %93 = vector.broadcast %cst_44 : f32 to vector<1x128xf32>
    %94 = arith.maximumf %92, %93 : vector<1x128xf32>
    %c0_45 = arith.constant 0 : index
    %c5_46 = arith.constant 5 : index
    %95 = memref.load %arg4[%c0_45, %c5_46] : memref<1x8xf32, #tpu.memory_space<smem>>
    %96 = vector.broadcast %95 : f32 to vector<1x128xf32>
    %97 = arith.mulf %96, %94 : vector<1x128xf32>
    %98 = arith.addf %82, %97 : vector<1x128xf32>
    %c6 = arith.constant 6 : index
    %c0_47 = arith.constant 0 : index
    %99 = memref.load %arg2[%c6, %c0_47] : memref<8x2xf32, #tpu.memory_space<smem>>
    %100 = vector.broadcast %99 : f32 to vector<1x128xf32>
    %101 = arith.mulf %100, %1 : vector<1x128xf32>
    %c6_48 = arith.constant 6 : index
    %c1_49 = arith.constant 1 : index
    %102 = memref.load %arg2[%c6_48, %c1_49] : memref<8x2xf32, #tpu.memory_space<smem>>
    %103 = vector.broadcast %102 : f32 to vector<1x128xf32>
    %104 = arith.mulf %103, %3 : vector<1x128xf32>
    %105 = arith.addf %101, %104 : vector<1x128xf32>
    %c6_50 = arith.constant 6 : index
    %106 = memref.load %arg3[%c6_50] : memref<8xf32, #tpu.memory_space<smem>>
    %107 = vector.broadcast %106 : f32 to vector<1x128xf32>
    %108 = arith.addf %105, %107 : vector<1x128xf32>
    %cst_51 = arith.constant 0.000000e+00 : f32
    %109 = vector.broadcast %cst_51 : f32 to vector<1x128xf32>
    %110 = arith.maximumf %108, %109 : vector<1x128xf32>
    %c0_52 = arith.constant 0 : index
    %c6_53 = arith.constant 6 : index
    %111 = memref.load %arg4[%c0_52, %c6_53] : memref<1x8xf32, #tpu.memory_space<smem>>
    %112 = vector.broadcast %111 : f32 to vector<1x128xf32>
    %113 = arith.mulf %112, %110 : vector<1x128xf32>
    %114 = arith.addf %98, %113 : vector<1x128xf32>
    %c7 = arith.constant 7 : index
    %c0_54 = arith.constant 0 : index
    %115 = memref.load %arg2[%c7, %c0_54] : memref<8x2xf32, #tpu.memory_space<smem>>
    %116 = vector.broadcast %115 : f32 to vector<1x128xf32>
    %117 = arith.mulf %116, %1 : vector<1x128xf32>
    %c7_55 = arith.constant 7 : index
    %c1_56 = arith.constant 1 : index
    %118 = memref.load %arg2[%c7_55, %c1_56] : memref<8x2xf32, #tpu.memory_space<smem>>
    %119 = vector.broadcast %118 : f32 to vector<1x128xf32>
    %120 = arith.mulf %119, %3 : vector<1x128xf32>
    %121 = arith.addf %117, %120 : vector<1x128xf32>
    %c7_57 = arith.constant 7 : index
    %122 = memref.load %arg3[%c7_57] : memref<8xf32, #tpu.memory_space<smem>>
    %123 = vector.broadcast %122 : f32 to vector<1x128xf32>
    %124 = arith.addf %121, %123 : vector<1x128xf32>
    %cst_58 = arith.constant 0.000000e+00 : f32
    %125 = vector.broadcast %cst_58 : f32 to vector<1x128xf32>
    %126 = arith.maximumf %124, %125 : vector<1x128xf32>
    %c0_59 = arith.constant 0 : index
    %c7_60 = arith.constant 7 : index
    %127 = memref.load %arg4[%c0_59, %c7_60] : memref<1x8xf32, #tpu.memory_space<smem>>
    %128 = vector.broadcast %127 : f32 to vector<1x128xf32>
    %129 = arith.mulf %128, %126 : vector<1x128xf32>
    %130 = arith.addf %114, %129 : vector<1x128xf32>
    %c0_61 = arith.constant 0 : index
    %131 = memref.load %arg5[%c0_61] : memref<1xf32, #tpu.memory_space<smem>>
    %132 = vector.broadcast %131 : f32 to vector<1x128xf32>
    %133 = arith.addf %130, %132 : vector<1x128xf32>
    %c0_62 = arith.constant 0 : index
    %c0_63 = arith.constant 0 : index
    %134 = vector.load %arg6[%c0_62, %c0_63] : memref<1x128xf32, #tpu.memory_space<vmem>>, vector<1x128xf32>
    tpu.vector_store %arg6[%c0_62, %c0_63], %133 {strides = array<i32>} : memref<1x128xf32, #tpu.memory_space<vmem>>, vector<1x128xf32>,
    return
  }
  func.func @transform_0(%arg0: i32) -> (i32, i32, i32) {
    %c0_i32 = arith.constant 0 : i32
    %c0_i32_0 = arith.constant 0 : i32
    %c0_i32_1 = arith.constant 0 : i32
    return %c0_i32, %arg0, %c0_i32_0 : i32, i32, i32
  }
  func.func @transform_1(%arg0: i32) -> (i32, i32) {
    %c0_i32 = arith.constant 0 : i32
    %c0_i32_0 = arith.constant 0 : i32
    %c0_i32_1 = arith.constant 0 : i32
    return %c0_i32, %c0_i32_0 : i32, i32
  }
  func.func @transform_2(%arg0: i32) -> i32 {
    %c0_i32 = arith.constant 0 : i32
    %c0_i32_0 = arith.constant 0 : i32
    return %c0_i32 : i32
  }
  func.func @transform_3(%arg0: i32) -> (i32, i32) {
    %c0_i32 = arith.constant 0 : i32
    %c0_i32_0 = arith.constant 0 : i32
    %c0_i32_1 = arith.constant 0 : i32
    return %c0_i32, %c0_i32_0 : i32, i32
  }
  func.func @transform_4(%arg0: i32) -> i32 {
    %c0_i32 = arith.constant 0 : i32
    %c0_i32_0 = arith.constant 0 : i32
    return %c0_i32 : i32
  }
  func.func @transform_5(%arg0: i32) -> (i32, i32) {
    %c0_i32 = arith.constant 0 : i32
    %c0_i32_0 = arith.constant 0 : i32
    return %arg0, %c0_i32 : i32, i32
  }
}

</mosaic_0001>

<llo_original>
// kernel: tpu_custom_call.1
$region0: #{tpu_custom_call.1}
  #allocation0 [shape = 'u32[]', space=smem, size = 0x4, offset = 0x4, fixed_abs, tag = 'smem constant byte address 0x4 - core index']
  #allocation1 [shape = 'u32[144,128]{1,0:T(1,128)}', space=vmem, size = 0x12000, scoped, tag = 'internal scratch']
  #allocation2 [shape = 'f32[1]{0:T(128)S(6)}', space=smem, size = 0x200, scoped, tag = 'scoped memory for tpu_custom_call.1']
  %s0 = inlined_call_operand.vmem [shape: f32[2,1,128], index: 0, kind: input, shape index: {}]
  %s1 = inlined_call_operand.vmem [shape: f32[8,2], index: 1, kind: input, shape index: {}]
  %s2 = inlined_call_operand.vmem [shape: f32[8], index: 2, kind: input, shape index: {}]
  %s3 = inlined_call_operand.vmem [shape: f32[1,8], index: 3, kind: input, shape index: {}]
  %s4 = inlined_call_operand.<no memory space> [shape: f32[1], index: 4, kind: input, shape index: {}]
  %s5 = inlined_call_operand.hbm [shape: f32[1,128], index: 5, kind: output, shape index: {}]
  %s6 = sld [smem:[#allocation0]]
  $region42: #{tpu_custom_call.1} parent=0
    _
  %s8 = ssub.s32 1, %s6
  %s9 = scalar_select 0, %s8, %s6
  %10 = sst [smem:[#allocation2]] %s4
  $region1: #{tpu_custom_call.1} parent=0
    #allocation3 [shape = 'u8[4096]{0}', space=smem, size = 0x1000, scoped, tag = 'input window, operand 1, single buffered']
    #allocation4 [shape = 's32[1]{0}', space=sflag, size = 0x4, scoped, tag = 'scoped memory for tpu_custom_call.1']
    #allocation5 [shape = 's32[1]{0}', space=sflag, size = 0x4, scoped, tag = 'scoped memory for tpu_custom_call.1']
    #allocation6 [shape = 'u8[512]{0}', space=smem, size = 0x200, scoped, tag = 'input window, operand 2, single buffered']
    #allocation7 [shape = 's32[1]{0}', space=sflag, size = 0x4, scoped, tag = 'scoped memory for tpu_custom_call.1']
    #allocation8 [shape = 'u8[512]{0}', space=smem, size = 0x200, scoped, tag = 'input window, operand 3, single buffered']
    #allocation9 [shape = 'u8[512]{0}', space=vmem, size = 0x400, scoped, tag = 'output window, operand 0, single buffered']
    %11 = vsyncpa [#allocation5], 0
    %12 = vsyncpa [#allocation7], 0
    %13 = vsyncpa [#allocation4], 0
    // Predicated region
    $region2: #{tpu_custom_call.1} parent=1 // pred_check
      _
    $region3: #{tpu_custom_call.1} parent=1 // pred_check_branch
      %15 = sbr.rel (0) target = $region5
    $region4: #{tpu_custom_call.1} parent=1 // pred_region
      _
    $region5: #{tpu_custom_call.1} parent=1 // pred_fallthru
      _
    // Predicated region
    $region6: #{tpu_custom_call.1} parent=1 // pred_check
      _
    $region7: #{tpu_custom_call.1} parent=1 // pred_check_branch
      %17 = sbr.rel (0) target = $region9
    $region8: #{tpu_custom_call.1} parent=1 // pred_region
      %s19 = ssub.s32 128, 128
      %20 = vsyncadd [#allocation5], %s19
      %s22 = sshll.u32 %s1, 4
      %s23 = int_to_ptr.vmem [resolvable:$true] %s22
      %25 = dma.vmem_to_smem %s23, 128, [#allocation3], [#allocation5]
    $region9: #{tpu_custom_call.1} parent=1 // pred_fallthru
      _
    // Predicated region
    $region10: #{tpu_custom_call.1} parent=1 // pred_check
      _
    $region11: #{tpu_custom_call.1} parent=1 // pred_check_branch
      %27 = sbr.rel (0) target = $region13
    $region12: #{tpu_custom_call.1} parent=1 // pred_region
      %s29 = ssub.s32 16, 16
      %30 = vsyncadd [#allocation7], %s29
      %s32 = sshll.u32 %s2, 4
      %s33 = int_to_ptr.vmem [resolvable:$true] %s32
      %35 = dma.vmem_to_smem %s33, 16, [#allocation6], [#allocation7]
    $region13: #{tpu_custom_call.1} parent=1 // pred_fallthru
      _
    // Predicated region
    $region14: #{tpu_custom_call.1} parent=1 // pred_check
      _
    $region15: #{tpu_custom_call.1} parent=1 // pred_check_branch
      %37 = sbr.rel (0) target = $region17
    $region16: #{tpu_custom_call.1} parent=1 // pred_region
      %s39 = ssub.s32 16, 16
      %40 = vsyncadd [#allocation7], %s39
      %s42 = sshll.u32 %s3, 4
      %s43 = int_to_ptr.vmem [resolvable:$true] %s42
      %45 = dma.vmem_to_smem %s43, 16, [#allocation8], [#allocation7]
    $region17: #{tpu_custom_call.1} parent=1 // pred_fallthru
      _
    // Predicated region
    $region18: #{tpu_custom_call.1} parent=1 // pred_check
      _
    $region19: #{tpu_custom_call.1} parent=1 // pred_check_branch
      %47 = sbr.rel (0) target = $region21
    $region20: #{tpu_custom_call.1} parent=1 // pred_region
      _
    $region21: #{tpu_custom_call.1} parent=1 // pred_fallthru
      _
    // Predicated region
    $region22: #{tpu_custom_call.1} parent=1 // pred_check
      _
    $region23: #{tpu_custom_call.1} parent=1 // pred_check_branch
      %49 = sbr.rel (0) target = $region25
    $region24: #{tpu_custom_call.1} parent=1 // pred_region
      %50 = dma.done [#allocation5], 128
    $region25: #{tpu_custom_call.1} parent=1 // pred_fallthru
      _
    // Predicated region
    $region26: #{tpu_custom_call.1} parent=1 // pred_check
      _
    $region27: #{tpu_custom_call.1} parent=1 // pred_check_branch
      %52 = sbr.rel (0) target = $region29
    $region28: #{tpu_custom_call.1} parent=1 // pred_region
      %53 = dma.done [#allocation7], 16
    $region29: #{tpu_custom_call.1} parent=1 // pred_fallthru
      _
    // Predicated region
    $region30: #{tpu_custom_call.1} parent=1 // pred_check
      _
    $region31: #{tpu_custom_call.1} parent=1 // pred_check_branch
      %55 = sbr.rel (0) target = $region33
    $region32: #{tpu_custom_call.1} parent=1 // pred_region
      %56 = dma.done [#allocation7], 16
    $region33: #{tpu_custom_call.1} parent=1 // pred_fallthru
      _
    %57 = sfence
    %v58 = vld [vmem:[%s0] sm:$0x1]
    %s59 = scalar_lea.vmem %s0, 1
    %v60 = vld [vmem:[%s59] sm:$0x1]
    %s61 = sld [smem:[#allocation3]]
    %v62 = vstv %s61
    %v63 = vmul.f32 %v62, %v58
    %s64 = sld [smem:[#allocation3 + $0x1]]
    %v65 = vstv %s64
    %v66 = vmul.f32 %v65, %v60
    %v67 = vadd.f32 %v63, %v66
    %s68 = sld [smem:[#allocation6]]
    %v69 = vstv %s68
    %v70 = vadd.f32 %v67, %v69
    %v71 = vmax.f32 %v70, 0.0
    %s72 = sld [smem:[#allocation8]]
    %v73 = vstv %s72
    %v74 = vmul.f32 %v73, %v71
    %s75 = sld [smem:[#allocation3 + $0x80]]
    %v76 = vstv %s75
    %v77 = vmul.f32 %v76, %v58
    %s78 = sld [smem:[#allocation3 + $0x81]]
    %v79 = vstv %s78
    %v80 = vmul.f32 %v79, %v60
    %v81 = vadd.f32 %v77, %v80
    %s82 = sld [smem:[#allocation6 + $0x1]]
    %v83 = vstv %s82
    %v84 = vadd.f32 %v81, %v83
    %v85 = vmax.f32 %v84, 0.0
    %s86 = sld [smem:[#allocation8 + $0x1]]
    %v87 = vstv %s86
    %v88 = vmul.f32 %v87, %v85
    %v89 = vadd.f32 %v74, %v88
    %s90 = sld [smem:[#allocation3 + $0x100]]
    %v91 = vstv %s90
    %v92 = vmul.f32 %v91, %v58
    %s93 = sld [smem:[#allocation3 + $0x101]]
    %v94 = vstv %s93
    %v95 = vmul.f32 %v94, %v60
    %v96 = vadd.f32 %v92, %v95
    %s97 = sld [smem:[#allocation6 + $0x2]]
    %v98 = vstv %s97
    %v99 = vadd.f32 %v96, %v98
    %v100 = vmax.f32 %v99, 0.0
    %s101 = sld [smem:[#allocation8 + $0x2]]
    %v102 = vstv %s101
    %v103 = vmul.f32 %v102, %v100
    %v104 = vadd.f32 %v89, %v103
    %s105 = sld [smem:[#allocation3 + $0x180]]
    %v106 = vstv %s105
    %v107 = vmul.f32 %v106, %v58
    %s108 = sld [smem:[#allocation3 + $0x181]]
    %v109 = vstv %s108
    %v110 = vmul.f32 %v109, %v60
    %v111 = vadd.f32 %v107, %v110
    %s112 = sld [smem:[#allocation6 + $0x3]]
    %v113 = vstv %s112
    %v114 = vadd.f32 %v111, %v113
    %v115 = vmax.f32 %v114, 0.0
    %s116 = sld [smem:[#allocation8 + $0x3]]
    %v117 = vstv %s116
    %v118 = vmul.f32 %v117, %v115
    %v119 = vadd.f32 %v104, %v118
    %s120 = sld [smem:[#allocation3 + $0x200]]
    %v121 = vstv %s120
    %v122 = vmul.f32 %v121, %v58
    %s123 = sld [smem:[#allocation3 + $0x201]]
    %v124 = vstv %s123
    %v125 = vmul.f32 %v124, %v60
    %v126 = vadd.f32 %v122, %v125
    %s127 = sld [smem:[#allocation6 + $0x4]]
    %v128 = vstv %s127
    %v129 = vadd.f32 %v126, %v128
    %v130 = vmax.f32 %v129, 0.0
    %s131 = sld [smem:[#allocation8 + $0x4]]
    %v132 = vstv %s131
    %v133 = vmul.f32 %v132, %v130
    %v134 = vadd.f32 %v119, %v133
    %s135 = sld [smem:[#allocation3 + $0x280]]
    %v136 = vstv %s135
    %v137 = vmul.f32 %v136, %v58
    %s138 = sld [smem:[#allocation3 + $0x281]]
    %v139 = vstv %s138
    %v140 = vmul.f32 %v139, %v60
    %v141 = vadd.f32 %v137, %v140
    %s142 = sld [smem:[#allocation6 + $0x5]]
    %v143 = vstv %s142
    %v144 = vadd.f32 %v141, %v143
    %v145 = vmax.f32 %v144, 0.0
    %s146 = sld [smem:[#allocation8 + $0x5]]
    %v147 = vstv %s146
    %v148 = vmul.f32 %v147, %v145
    %v149 = vadd.f32 %v134, %v148
    %s150 = sld [smem:[#allocation3 + $0x300]]
    %v151 = vstv %s150
    %v152 = vmul.f32 %v151, %v58
    %s153 = sld [smem:[#allocation3 + $0x301]]
    %v154 = vstv %s153
    %v155 = vmul.f32 %v154, %v60
    %v156 = vadd.f32 %v152, %v155
    %s157 = sld [smem:[#allocation6 + $0x6]]
    %v158 = vstv %s157
    %v159 = vadd.f32 %v156, %v158
    %v160 = vmax.f32 %v159, 0.0
    %s161 = sld [smem:[#allocation8 + $0x6]]
    %v162 = vstv %s161
    %v163 = vmul.f32 %v162, %v160
    %v164 = vadd.f32 %v149, %v163
    %s165 = sld [smem:[#allocation3 + $0x380]]
    %v166 = vstv %s165
    %v167 = vmul.f32 %v166, %v58
    %s168 = sld [smem:[#allocation3 + $0x381]]
    %v169 = vstv %s168
    %v170 = vmul.f32 %v169, %v60
    %v171 = vadd.f32 %v167, %v170
    %s172 = sld [smem:[#allocation6 + $0x7]]
    %v173 = vstv %s172
    %v174 = vadd.f32 %v171, %v173
    %v175 = vmax.f32 %v174, 0.0
    %s176 = sld [smem:[#allocation8 + $0x7]]
    %v177 = vstv %s176
    %v178 = vmul.f32 %v177, %v175
    %v179 = vadd.f32 %v164, %v178
    %s180 = sld [smem:[#allocation2]]
    %v181 = vstv %s180
    %v182 = vadd.f32 %v179, %v181
    %183 = vst [vmem:[#allocation9] sm:$0x1] %v182
    // Predicated region
    $region34: #{tpu_custom_call.1} parent=1 // pred_check
      _
    $region35: #{tpu_custom_call.1} parent=1 // pred_check_branch
      %185 = sbr.rel (0) target = $region37
    $region36: #{tpu_custom_call.1} parent=1 // pred_region
      %s187 = ssub.s32 16, 16
      %188 = vsyncadd [#allocation4], %s187
      %s190 = sshll.u32 [#allocation9], 4
      %s191 = int_to_ptr.vmem [resolvable:$true] %s190
      %193 = dma.vmem_to_hbm [thread:$0]  %s191, 16, %s5, [#allocation4]
    $region37: #{tpu_custom_call.1} parent=1 // pred_fallthru
      _
    // Predicated region
    $region38: #{tpu_custom_call.1} parent=1 // pred_check
      _
    $region39: #{tpu_custom_call.1} parent=1 // pred_check_branch
      %195 = sbr.rel (0) target = $region41
    $region40: #{tpu_custom_call.1} parent=1 // pred_region
      %196 = dma.done [#allocation4], 16
    $region41: #{tpu_custom_call.1} parent=1 // pred_fallthru
      _
    %197 = vsyncpa [#allocation4], 1
    %198 = vsyncpa [#allocation5], 1
    %199 = vsyncpa [#allocation7], 1

</llo_original>
